<compile_context>
chip_gen: v7x
topology: tpu7x:2x2x1
jax: 0.10.0
libtpu: 0.0.40
codegen_flags: <defaults>
</compile_context>

<pallas_src>
import numpy as np
import jax
import jax.numpy as jnp
from jax.experimental import pallas as pl
from jax.experimental.pallas import tpu as pltpu


def _round_up(x, m):
    return (x + m - 1) // m * m


def _pad2d(x, rows, cols):
    pr, pc = rows - x.shape[0], cols - x.shape[1]
    if pr or pc:
        x = jnp.pad(x, ((0, pr), (0, pc)))
    return x


def social_encoder_kernel(self_ref, adj_ref, feat_ref, invdeg_ref,
                          w_self_ref, w_neigh_ref, b_ref, out_ref, acc_ref):
    """One (batch-tile i, neighbor-tile k) grid step.

    acc_ref: f32 (tb, D) running neighbor-feature SUM over the k axis.
    Finalize applies 1/deg (mean aggregator) in f32, then computes
    relu(self @ W_self + neigh_mean @ W_neigh + b) == relu(Linear(cat(...))).
    """
    k = pl.program_id(1)

    @pl.when(k == 0)
    def _init():
        acc_ref[...] = jnp.zeros_like(acc_ref)

    # Neighbor sum for this N-slice on the MXU. Adjacency is binary (0/1 is
    # exact in bf16); tiles are cast to bf16 here so HBM only ever carries
    # the original f32 arrays (no wrapper-side copies).
    acc_ref[...] += jnp.dot(adj_ref[...].astype(jnp.bfloat16),
                            feat_ref[...].astype(jnp.bfloat16),
                            preferred_element_type=jnp.float32)

    @pl.when(k == pl.num_programs(1) - 1)
    def _finalize():
        neigh_mean = acc_ref[...] * invdeg_ref[...]            # f32 mean
        h = jnp.dot(self_ref[...].astype(jnp.bfloat16), w_self_ref[...],
                    preferred_element_type=jnp.float32)
        h += jnp.dot(neigh_mean.astype(jnp.bfloat16), w_neigh_ref[...],
                     preferred_element_type=jnp.float32)
        h += b_ref[...]
        out_ref[...] = jnp.maximum(h, 0.0).astype(out_ref.dtype)


def prepare_params(w, b):
    """Hoisted one-time prep of nn.Linear(2D -> D) parameters.

    w: (D, 2D) torch-style (out, in) weight;  b: (D,) bias.
    Returns bf16 (D, D) W_self / W_neigh (pre-transposed so the kernel does
    plain row-major dots) and the f32 (1, D) bias row.
    """
    D = w.shape[0]
    assert w.shape == (D, 2 * D)
    w_self = jnp.transpose(w[:, :D]).astype(jnp.bfloat16)     # self half
    w_neigh = jnp.transpose(w[:, D:]).astype(jnp.bfloat16)    # neighbor half
    return w_self, w_neigh, jnp.asarray(b, jnp.float32).reshape(1, D)


def social_encoder(self_feats, adj, inv_deg, all_feats, w_self, w_neigh, b_row,
                   *, tb_max=512, tn_max=2048,
                   resident_budget_bytes=12 << 20):
    """self_feats: (B, D) f32  gathered self features (== features(nodes).t())
       adj:        (B, N) f32  binary social adjacency rows for the batch
       inv_deg:    (B, 1) f32  1 / max(#neighbors, 1)  (mean aggregator)
       all_feats:  (N, D) f32  full user feature table (neighbor source)
       w_self/w_neigh: (D, D) bf16, b_row: (1, D) f32  from prepare_params
       returns:    (B, D) f32  relu(Linear(cat([self, mean_neigh], 1)))"""
    B, D = self_feats.shape
    N, Df = all_feats.shape
    assert Df == D and adj.shape == (B, N) and inv_deg.shape == (B, 1)

    # --- batch tiling: multiple of 16 (bf16 sublane packing), or full B ----
    if B <= tb_max:
        tb, Bp = B, B
    else:
        tb = _round_up(tb_max, 16)
        Bp = _round_up(B, tb)

    # --- neighbor axis: keep the whole table resident if it fits VMEM ------
    feat_bytes = N * D * all_feats.dtype.itemsize
    if 2 * feat_bytes <= resident_budget_bytes:
        tn, Np = N, N                       # resident table, single k step
    else:
        tn = min(_round_up(tn_max, 128), _round_up(N, 128))
        Np = _round_up(N, tn)

    # Zero-pad ONLY ragged tails. Zeroed adjacency columns keep the neighbor
    # sum exact; padded batch rows are sliced off below.
    self_p = _pad2d(self_feats, Bp, D)
    adj_p = _pad2d(adj, Bp, Np)
    feat_p = _pad2d(all_feats, Np, D)
    invdeg_p = _pad2d(inv_deg, Bp, 1)

    grid = (Bp // tb, Np // tn)

    # VMEM budget: double buffers on pipelined inputs + output + scratch,
    # kept under v7x's 64 MiB per-TC VMEM.
    vmem_est = (2 * (tb * D + tb * tn + tn * D + tb + tb * D) * 4
                + 2 * (2 * D * D * 2 + D * 4)
                + tb * D * 4)
    vmem_limit = int(min(64 << 20, max(32 << 20, int(1.5 * vmem_est))))

    flops = 2 * Bp * Np * D + 4 * Bp * D * D
    bytes_accessed = (4 * (Bp * D + Bp * Np + Np * D + Bp + Bp * D)
                      + 4 * D * D + 4 * D)

    out_p = pl.pallas_call(
        social_encoder_kernel,
        out_shape=jax.ShapeDtypeStruct((Bp, D), jnp.float32),
        grid_spec=pltpu.PrefetchScalarGridSpec(
            num_scalar_prefetch=0,
            grid=grid,
            in_specs=[
                pl.BlockSpec((tb, D), lambda i, k: (i, 0)),     # self feats
                pl.BlockSpec((tb, tn), lambda i, k: (i, k)),    # adjacency
                pl.BlockSpec((tn, D), lambda i, k: (k, 0)),     # feat table
                pl.BlockSpec((tb, 1), lambda i, k: (i, 0)),     # 1/deg
                pl.BlockSpec((D, D), lambda i, k: (0, 0)),      # W_self
                pl.BlockSpec((D, D), lambda i, k: (0, 0)),      # W_neigh
                pl.BlockSpec((1, D), lambda i, k: (0, 0)),      # bias
            ],
            out_specs=pl.BlockSpec((tb, D), lambda i, k: (i, 0)),
            scratch_shapes=[pltpu.VMEM((tb, D), jnp.float32)],
        ),
        compiler_params=pltpu.CompilerParams(
            dimension_semantics=("parallel", "arbitrary"),
            vmem_limit_bytes=vmem_limit),
        cost_estimate=pl.CostEstimate(
            flops=flops, transcendentals=0, bytes_accessed=bytes_accessed),
    )(self_p, adj_p, feat_p, invdeg_p, w_self, w_neigh, b_row)

    return out_p[:B] if Bp != B else out_p


def reference(self_feats, adj, inv_deg, all_feats, w, b):
    neigh = (adj @ all_feats) * inv_deg
    combined = jnp.concatenate([self_feats, neigh], axis=1)
    return jnp.maximum(combined @ w.T + b, 0.0)


def _build_batch(nodes, social_adj_lists, feat_table):
    """Graph glue matching the nn.Module: gather self features, build dense
    binary adjacency rows and 1/deg for the mean aggregator."""
    num_users = feat_table.shape[0]
    nodes_np = np.asarray(nodes)
    adj_np = np.zeros((nodes_np.shape[0], num_users), dtype=np.float32)
    for bi, node in enumerate(nodes_np):
        for nb in social_adj_lists[int(node)]:
            adj_np[bi, nb] = 1.0
    adj = jnp.asarray(adj_np)
    deg = np.maximum(adj_np.sum(axis=1, keepdims=True), 1.0)
    inv_deg = jnp.asarray(1.0 / deg, dtype=jnp.float32)
    self_feats = jnp.take(feat_table, jnp.asarray(nodes_np, jnp.int32), axis=0)
    return self_feats, adj, inv_deg


if __name__ == "__main__":
    # Small, deterministic synthetic problem.
    num_users = 200     # total users in the graph
    embed_dim = 64      # embed_dim
    batch = 24          # batch of node ids

    key = jax.random.PRNGKey(0)
    k_feat, k_w, k_b = jax.random.split(key, 3)

    # Feature table: stands in for `features(nodes)` -> .t()
    feat_table = jax.random.normal(k_feat, (num_users, embed_dim),
                                   dtype=jnp.float32)

    # nn.Linear(2*embed_dim, embed_dim) parameters, deterministic init.
    w = jax.random.normal(k_w, (embed_dim, 2 * embed_dim),
                          dtype=jnp.float32) * 0.1
    b = jax.random.normal(k_b, (embed_dim,), dtype=jnp.float32) * 0.1

    # social_adj_lists: user i -> {i+1, i+3, i+7, i+11} (mod num_users).
    social_adj_lists = {
        i: [(i + 1) % num_users, (i + 3) % num_users,
            (i + 7) % num_users, (i + 11) % num_users]
        for i in range(num_users)
    }

    nodes = jnp.arange(batch, dtype=jnp.int32)
    self_feats, adj, inv_deg = _build_batch(nodes, social_adj_lists, feat_table)

    # Hoisted (one-time) weight transpose / split.
    w_self, w_neigh, b_row = prepare_params(w, b)

    ref = reference(self_feats, adj, inv_deg, feat_table, w, b)

    # 1) Default config: whole feature table VMEM-resident (single k step).
    out = social_encoder(self_feats, adj, inv_deg, feat_table,
                         w_self, w_neigh, b_row)
    out = jax.block_until_ready(out)
    assert out.shape == (batch, embed_dim)
    assert jnp.allclose(out, ref, atol=3e-2, rtol=3e-2), (
        float(jnp.max(jnp.abs(out - ref))))

    # 2) Force the streaming path (k reduction axis + ragged-tail padding).
    out_s = social_encoder(self_feats, adj, inv_deg, feat_table,
                           w_self, w_neigh, b_row,
                           tb_max=16, tn_max=128, resident_budget_bytes=0)
    out_s = jax.block_until_ready(out_s)
    assert jnp.allclose(out_s, ref, atol=3e-2, rtol=3e-2), (
        float(jnp.max(jnp.abs(out_s - ref))))

    print("KERNEL_OK")
</pallas_src>

<mosaic_0001>
module attributes {stable_mosaic.version = 11 : i64} {
  func.func @social_encoder_kernel(%arg0: i32, %arg1: i32, %arg2: memref<24x64xf32, #tpu.memory_space<vmem>>, %arg3: memref<24x200xf32, #tpu.memory_space<vmem>>, %arg4: memref<200x64xf32, #tpu.memory_space<vmem>>, %arg5: memref<24x1xf32, #tpu.memory_space<vmem>>, %arg6: memref<64x64xbf16, #tpu.memory_space<vmem>>, %arg7: memref<64x64xbf16, #tpu.memory_space<vmem>>, %arg8: memref<1x64xf32, #tpu.memory_space<vmem>>, %arg9: memref<24x64xf32, #tpu.memory_space<vmem>>, %arg10: memref<24x64xf32, #tpu.memory_space<vmem>>) attributes {dimension_semantics = [#tpu.dimension_semantics<parallel>, #tpu.dimension_semantics<arbitrary>], iteration_bounds = array<i64: 1, 1>, scalar_prefetch = 0 : i64, scratch_operands = 1 : i64, tpu.core_type = #tpu.core_type<tc>, window_params = [{transform_indices = @transform_0, window_bounds = array<i64: 24, 64>}, {transform_indices = @transform_1, window_bounds = array<i64: 24, 200>}, {transform_indices = @transform_2, window_bounds = array<i64: 200, 64>}, {transform_indices = @transform_3, window_bounds = array<i64: 24, 1>}, {pipeline_mode = #tpu.pipeline_mode<synchronous>, transform_indices = @transform_4, window_bounds = array<i64: 64, 64>}, {pipeline_mode = #tpu.pipeline_mode<synchronous>, transform_indices = @transform_5, window_bounds = array<i64: 64, 64>}, {pipeline_mode = #tpu.pipeline_mode<synchronous>, transform_indices = @transform_6, window_bounds = array<i64: 1, 64>}, {transform_indices = @transform_7, window_bounds = array<i64: 24, 64>}]} {
    %c0_i32 = arith.constant 0 : i32
    %0 = arith.cmpi eq, %arg1, %c0_i32 : i32
    %1 = arith.extui %0 : i1 to i32
    %c0_i32_0 = arith.constant 0 : i32
    %2 = arith.cmpi ne, %1, %c0_i32_0 : i32
    scf.if %2 {
      %cst_10 = arith.constant 0.000000e+00 : f32
      %14 = vector.broadcast %cst_10 : f32 to vector<24x64xf32>
      %c0_11 = arith.constant 0 : index
      %c0_12 = arith.constant 0 : index
      %15 = vector.load %arg10[%c0_11, %c0_12] : memref<24x64xf32, #tpu.memory_space<vmem>>, vector<24x64xf32>
      tpu.vector_store %arg10[%c0_11, %c0_12], %14 {strides = array<i32>} : memref<24x64xf32, #tpu.memory_space<vmem>>, vector<24x64xf32>,
    } else {
    }
    %c0 = arith.constant 0 : index
    %c0_1 = arith.constant 0 : index
    %3 = vector.load %arg10[%c0, %c0_1] : memref<24x64xf32, #tpu.memory_space<vmem>>, vector<24x64xf32>
    %c0_2 = arith.constant 0 : index
    %c0_3 = arith.constant 0 : index
    %4 = vector.load %arg3[%c0_2, %c0_3] : memref<24x200xf32, #tpu.memory_space<vmem>>, vector<24x200xf32>
    %5 = arith.truncf %4 : vector<24x200xf32> to vector<24x200xbf16>
    %c0_4 = arith.constant 0 : index
    %c0_5 = arith.constant 0 : index
    %6 = vector.load %arg4[%c0_4, %c0_5] : memref<200x64xf32, #tpu.memory_space<vmem>>, vector<200x64xf32>
    %7 = arith.truncf %6 : vector<200x64xf32> to vector<200x64xbf16>
    %cst = arith.constant dense<0.000000e+00> : vector<24x64xf32>
    %8 = tpu.matmul %5, %7, %cst {dimension_numbers = #tpu.dot_dimension_numbers<[1], [0], [0], [1], [0, 0, 1, 1], [], []>} : vector<24x200xbf16>, vector<200x64xbf16>, vector<24x64xf32> -> vector<24x64xf32>
    %9 = arith.addf %3, %8 : vector<24x64xf32>
    %c0_6 = arith.constant 0 : index
    %c0_7 = arith.constant 0 : index
    %10 = vector.load %arg10[%c0_6, %c0_7] : memref<24x64xf32, #tpu.memory_space<vmem>>, vector<24x64xf32>
    tpu.vector_store %arg10[%c0_6, %c0_7], %9 {strides = array<i32>} : memref<24x64xf32, #tpu.memory_space<vmem>>, vector<24x64xf32>,
    %c0_i32_8 = arith.constant 0 : i32
    %11 = arith.cmpi eq, %arg1, %c0_i32_8 : i32
    %12 = arith.extui %11 : i1 to i32
    %c0_i32_9 = arith.constant 0 : i32
    %13 = arith.cmpi ne, %12, %c0_i32_9 : i32
    scf.if %13 {
      %c0_10 = arith.constant 0 : index
      %c0_11 = arith.constant 0 : index
      %14 = vector.load %arg10[%c0_10, %c0_11] : memref<24x64xf32, #tpu.memory_space<vmem>>, vector<24x64xf32>
      %c0_12 = arith.constant 0 : index
      %c0_13 = arith.constant 0 : index
      %15 = vector.load %arg5[%c0_12, %c0_13] : memref<24x1xf32, #tpu.memory_space<vmem>>, vector<24x1xf32>
      %16 = vector.broadcast %15 : vector<24x1xf32> to vector<24x64xf32>
      %17 = arith.mulf %14, %16 : vector<24x64xf32>
      %c0_14 = arith.constant 0 : index
      %c0_15 = arith.constant 0 : index
      %18 = vector.load %arg2[%c0_14, %c0_15] : memref<24x64xf32, #tpu.memory_space<vmem>>, vector<24x64xf32>
      %19 = arith.truncf %18 : vector<24x64xf32> to vector<24x64xbf16>
      %c0_16 = arith.constant 0 : index
      %c0_17 = arith.constant 0 : index
      %20 = vector.load %arg6[%c0_16, %c0_17] : memref<64x64xbf16, #tpu.memory_space<vmem>>, vector<64x64xbf16>
      %cst_18 = arith.constant dense<0.000000e+00> : vector<24x64xf32>
      %21 = tpu.matmul %19, %20, %cst_18 {dimension_numbers = #tpu.dot_dimension_numbers<[1], [0], [0], [1], [0, 0, 1, 1], [], []>} : vector<24x64xbf16>, vector<64x64xbf16>, vector<24x64xf32> -> vector<24x64xf32>
      %22 = arith.truncf %17 : vector<24x64xf32> to vector<24x64xbf16>
      %c0_19 = arith.constant 0 : index
      %c0_20 = arith.constant 0 : index
      %23 = vector.load %arg7[%c0_19, %c0_20] : memref<64x64xbf16, #tpu.memory_space<vmem>>, vector<64x64xbf16>
      %cst_21 = arith.constant dense<0.000000e+00> : vector<24x64xf32>
      %24 = tpu.matmul %22, %23, %cst_21 {dimension_numbers = #tpu.dot_dimension_numbers<[1], [0], [0], [1], [0, 0, 1, 1], [], []>} : vector<24x64xbf16>, vector<64x64xbf16>, vector<24x64xf32> -> vector<24x64xf32>
      %25 = arith.addf %21, %24 : vector<24x64xf32>
      %c0_22 = arith.constant 0 : index
      %c0_23 = arith.constant 0 : index
      %26 = vector.load %arg8[%c0_22, %c0_23] : memref<1x64xf32, #tpu.memory_space<vmem>>, vector<1x64xf32>
      %27 = vector.broadcast %26 : vector<1x64xf32> to vector<24x64xf32>
      %28 = arith.addf %25, %27 : vector<24x64xf32>
      %cst_24 = arith.constant 0.000000e+00 : f32
      %29 = vector.broadcast %cst_24 : f32 to vector<24x64xf32>
      %30 = arith.maximumf %28, %29 : vector<24x64xf32>
      %c0_25 = arith.constant 0 : index
      %c0_26 = arith.constant 0 : index
      %31 = vector.load %arg9[%c0_25, %c0_26] : memref<24x64xf32, #tpu.memory_space<vmem>>, vector<24x64xf32>
      tpu.vector_store %arg9[%c0_25, %c0_26], %30 {strides = array<i32>} : memref<24x64xf32, #tpu.memory_space<vmem>>, vector<24x64xf32>,
    } else {
    }
    return
  }
  func.func @transform_0(%arg0: i32, %arg1: i32) -> (i32, i32) {
    %c0_i32 = arith.constant 0 : i32
    %c0_i32_0 = arith.constant 0 : i32
    return %arg0, %c0_i32 : i32, i32
  }
  func.func @transform_1(%arg0: i32, %arg1: i32) -> (i32, i32) {
    %c0_i32 = arith.constant 0 : i32
    return %arg0, %arg1 : i32, i32
  }
  func.func @transform_2(%arg0: i32, %arg1: i32) -> (i32, i32) {
    %c0_i32 = arith.constant 0 : i32
    %c0_i32_0 = arith.constant 0 : i32
    return %arg1, %c0_i32 : i32, i32
  }
  func.func @transform_3(%arg0: i32, %arg1: i32) -> (i32, i32) {
    %c0_i32 = arith.constant 0 : i32
    %c0_i32_0 = arith.constant 0 : i32
    return %arg0, %c0_i32 : i32, i32
  }
  func.func @transform_4(%arg0: i32, %arg1: i32) -> (i32, i32) {
    %c0_i32 = arith.constant 0 : i32
    %c0_i32_0 = arith.constant 0 : i32
    %c0_i32_1 = arith.constant 0 : i32
    return %c0_i32, %c0_i32_0 : i32, i32
  }
  func.func @transform_5(%arg0: i32, %arg1: i32) -> (i32, i32) {
    %c0_i32 = arith.constant 0 : i32
    %c0_i32_0 = arith.constant 0 : i32
    %c0_i32_1 = arith.constant 0 : i32
    return %c0_i32, %c0_i32_0 : i32, i32
  }
  func.func @transform_6(%arg0: i32, %arg1: i32) -> (i32, i32) {
    %c0_i32 = arith.constant 0 : i32
    %c0_i32_0 = arith.constant 0 : i32
    %c0_i32_1 = arith.constant 0 : i32
    return %c0_i32, %c0_i32_0 : i32, i32
  }
  func.func @transform_7(%arg0: i32, %arg1: i32) -> (i32, i32) {
    %c0_i32 = arith.constant 0 : i32
    %c0_i32_0 = arith.constant 0 : i32
    return %arg0, %c0_i32 : i32, i32
  }
}

</mosaic_0001>

<llo_original>
// kernel: tpu_custom_call.1
$region0: #{tpu_custom_call.1}
  #allocation0 [shape = 'u32[]', space=smem, size = 0x4, offset = 0x4, fixed_abs, tag = 'smem constant byte address 0x4 - core index']
  #allocation1 [shape = 'u32[144,128]{1,0:T(1,128)}', space=vmem, size = 0x12000, scoped, tag = 'internal scratch']
  #allocation2 [shape = 'f32[24,64]{1,0:T(8,128)}', space=vmem, size = 0x3000, scoped, tag = 'scratch operand']
  %s0 = inlined_call_operand.vmem [shape: f32[24,64], index: 0, kind: input, shape index: {}]
  %s1 = inlined_call_operand.vmem [shape: f32[24,200], index: 1, kind: input, shape index: {}]
  %s2 = inlined_call_operand.vmem [shape: f32[200,64], index: 2, kind: input, shape index: {}]
  %s3 = inlined_call_operand.vmem [shape: f32[24,1], index: 3, kind: input, shape index: {}]
  %s4 = inlined_call_operand.vmem [shape: bf16[64,64], index: 4, kind: input, shape index: {}]
  %s5 = inlined_call_operand.vmem [shape: bf16[64,64], index: 5, kind: input, shape index: {}]
  %s6 = inlined_call_operand.vmem [shape: f32[1,64], index: 6, kind: input, shape index: {}]
  %s7 = inlined_call_operand.hbm [shape: f32[24,64], index: 7, kind: output, shape index: {}]
  %s8 = sld [smem:[#allocation0]]
  $region46: #{tpu_custom_call.1} parent=0
    _
  %s10 = ssub.s32 1, %s8
  %s11 = scalar_select 0, %s10, %s8
  $region1: #{tpu_custom_call.1} parent=0
    #allocation3 [shape = 'u8[12288]{0}', space=vmem, size = 0x3000, scoped, tag = 'output window, operand 0, single buffered']
    #allocation4 [shape = 's32[1]{0}', space=sflag, size = 0x4, scoped, tag = 'scoped memory for tpu_custom_call.1']
    %12 = vsyncpa [#allocation4], 0
    // Predicated region
    $region2: #{tpu_custom_call.1} parent=1 // pred_check
      _
    $region3: #{tpu_custom_call.1} parent=1 // pred_check_branch
      %14 = sbr.rel (0) target = $region5
    $region4: #{tpu_custom_call.1} parent=1 // pred_region
      _
    $region5: #{tpu_custom_call.1} parent=1 // pred_fallthru
      _
    // Predicated region
    $region6: #{tpu_custom_call.1} parent=1 // pred_check
      _
    $region7: #{tpu_custom_call.1} parent=1 // pred_check_branch
      %16 = sbr.rel (0) target = $region9
    $region8: #{tpu_custom_call.1} parent=1 // pred_region
      _
    $region9: #{tpu_custom_call.1} parent=1 // pred_fallthru
      _
    // Predicated region
    $region10: #{tpu_custom_call.1} parent=1 // pred_check
      _
    $region11: #{tpu_custom_call.1} parent=1 // pred_check_branch
      %18 = sbr.rel (0) target = $region13
    $region12: #{tpu_custom_call.1} parent=1 // pred_region
      _
    $region13: #{tpu_custom_call.1} parent=1 // pred_fallthru
      _
    // Predicated region
    $region14: #{tpu_custom_call.1} parent=1 // pred_check
      _
    $region15: #{tpu_custom_call.1} parent=1 // pred_check_branch
      %20 = sbr.rel (0) target = $region17
    $region16: #{tpu_custom_call.1} parent=1 // pred_region
      _
    $region17: #{tpu_custom_call.1} parent=1 // pred_fallthru
      _
    // Predicated region
    $region18: #{tpu_custom_call.1} parent=1 // pred_check
      _
    $region19: #{tpu_custom_call.1} parent=1 // pred_check_branch
      %22 = sbr.rel (0) target = $region21
    $region20: #{tpu_custom_call.1} parent=1 // pred_region
      _
    $region21: #{tpu_custom_call.1} parent=1 // pred_fallthru
      _
    // Predicated region
    $region22: #{tpu_custom_call.1} parent=1 // pred_check
      _
    $region23: #{tpu_custom_call.1} parent=1 // pred_check_branch
      %24 = sbr.rel (0) target = $region25
    $region24: #{tpu_custom_call.1} parent=1 // pred_region
      _
    $region25: #{tpu_custom_call.1} parent=1 // pred_fallthru
      _
    // Predicated region
    $region26: #{tpu_custom_call.1} parent=1 // pred_check
      _
    $region27: #{tpu_custom_call.1} parent=1 // pred_check_branch
      %26 = sbr.rel (0) target = $region29
    $region28: #{tpu_custom_call.1} parent=1 // pred_region
      _
    $region29: #{tpu_custom_call.1} parent=1 // pred_fallthru
      _
    %p28 = scmp.eq.s32.totalorder 0, 0
    // Predicated region
    $region30: #{tpu_custom_call.1} parent=1 // pred_check
      %p29 = pneg %p28
    $region31: #{tpu_custom_call.1} parent=1 // pred_check_branch
      %31 = sbr.rel (%p29) target = $region33
    $region32: #{tpu_custom_call.1} parent=1 // pred_region
      %vm32 = vcmask 523264
      %33 = vst.msk [vmem:[#allocation2] sm:$0xff] %vm32, 0.0
      %34 = vst.msk [vmem:[#allocation2 + $0x8] sm:$0xff] %vm32, 0.0
      %35 = vst.msk [vmem:[#allocation2 + $0x10] sm:$0xff] %vm32, 0.0
    $region33: #{tpu_custom_call.1} parent=1 // pred_fallthru
      _
    %v36 = vld [vmem:[#allocation2] sm:$0xff]
    %v37 = vld [vmem:[#allocation2 + $0x8] sm:$0xff]
    %v38 = vld [vmem:[#allocation2 + $0x10] sm:$0xff]
    %v39 = vld [vmem:[%s1] sm:$0xff]
    %v40 = vld [vmem:[%s1 + $0x8] sm:$0xff]
    %v41 = vld [vmem:[%s1 + $0x10] sm:$0xff]
    %v42 = vld [vmem:[%s1 + $0x18] sm:$0xff]
    %v43 = vld [vmem:[%s1 + $0x20] sm:$0xff]
    %v44 = vld [vmem:[%s1 + $0x28] sm:$0xff]
    %v45 = vpack.c.bf16 %v41, %v39
    %v46 = vpack.c.bf16 %v42, %v40
    %v47 = vpack.c.bf16 %v43, %v43
    %v48 = vpack.c.bf16 %v44, %v44
    %v49 = vld [vmem:[%s2] sm:$0xff]
    %v50 = vld [vmem:[%s2 + $0x8] sm:$0xff]
    %v51 = vld [vmem:[%s2 + $0x10] sm:$0xff]
    %v52 = vld [vmem:[%s2 + $0x18] sm:$0xff]
    %v53 = vld [vmem:[%s2 + $0x20] sm:$0xff]
    %v54 = vld [vmem:[%s2 + $0x28] sm:$0xff]
    %v55 = vld [vmem:[%s2 + $0x30] sm:$0xff]
    %v56 = vld [vmem:[%s2 + $0x38] sm:$0xff]
    %v57 = vld [vmem:[%s2 + $0x40] sm:$0xff]
    %v58 = vld [vmem:[%s2 + $0x48] sm:$0xff]
    %v59 = vld [vmem:[%s2 + $0x50] sm:$0xff]
    %v60 = vld [vmem:[%s2 + $0x58] sm:$0xff]
    %v61 = vld [vmem:[%s2 + $0x60] sm:$0xff]
    %v62 = vld [vmem:[%s2 + $0x68] sm:$0xff]
    %v63 = vld [vmem:[%s2 + $0x70] sm:$0xff]
    %v64 = vld [vmem:[%s2 + $0x78] sm:$0xff]
    %v65 = vld [vmem:[%s2 + $0x80] sm:$0xff]
    %v66 = vld [vmem:[%s2 + $0x88] sm:$0xff]
    %v67 = vld [vmem:[%s2 + $0x90] sm:$0xff]
    %v68 = vld [vmem:[%s2 + $0x98] sm:$0xff]
    %v69 = vld [vmem:[%s2 + $0xa0] sm:$0xff]
    %v70 = vld [vmem:[%s2 + $0xa8] sm:$0xff]
    %v71 = vld [vmem:[%s2 + $0xb0] sm:$0xff]
    %v72 = vld [vmem:[%s2 + $0xb8] sm:$0xff]
    %v73 = vld [vmem:[%s2 + $0xc0] sm:$0xff]
    %v74 = vpack.c.bf16 %v50, %v49
    %v75 = vpack.c.bf16 %v52, %v51
    %v76 = vpack.c.bf16 %v54, %v53
    %v77 = vpack.c.bf16 %v56, %v55
    %v78 = vpack.c.bf16 %v58, %v57
    %v79 = vpack.c.bf16 %v60, %v59
    %v80 = vpack.c.bf16 %v62, %v61
    %v81 = vpack.c.bf16 %v64, %v63
    %v82 = vpack.c.bf16 %v66, %v65
    %v83 = vpack.c.bf16 %v68, %v67
    %v84 = vpack.c.bf16 %v70, %v69
    %v85 = vpack.c.bf16 %v72, %v71
    %v86 = vpack.c.bf16 %v73, %v73
    %vm87 = vcmask 588800
    %v89 = vsel %vm87, %v46, 0
    %v92 = vsel %vm87, %v48, 0
    %vm94 = vcmask 1043456
    %v96 = vsel %vm94, %v86, 0
    %98 = vmatprep.subr.bf16.mxu0 0
    %99 = vmatpush1.bf16.msra.mxu0 %v74
    %100 = vmatprep.subr.bf16.mxu0 0
    %101 = vmatpush1.bf16.msra.mxu0 %v75
    %102 = vmatprep.subr.bf16.mxu0 0
    %103 = vmatpush1.bf16.msra.mxu0 %v76
    %104 = vmatprep.subr.bf16.mxu0 0
    %105 = vmatpush1.bf16.msra.mxu0 %v77
    %106 = vmatprep.subr.bf16.mxu0 0
    %107 = vmatpush1.bf16.msra.mxu0 %v78
    %108 = vmatprep.subr.bf16.mxu0 0
    %109 = vmatpush1.bf16.msra.mxu0 %v79
    %110 = vmatprep.subr.bf16.mxu0 0
    %111 = vmatpush1.bf16.msra.mxu0 %v80
    %112 = vmatprep.subr.bf16.mxu0 0
    %113 = vmatpush1.bf16.msra.mxu0 %v81
    %114 = vmatprep.subr.bf16.mxu0 0
    %115 = vmatpush1.bf16.msra.mxu0 %v82
    %116 = vmatprep.subr.bf16.mxu0 0
    %117 = vmatpush1.bf16.msra.mxu0 %v83
    %118 = vmatprep.subr.bf16.mxu0 0
    %119 = vmatpush1.bf16.msra.mxu0 %v84
    %120 = vmatprep.subr.bf16.mxu0 0
    %121 = vmatpush1.bf16.msra.mxu0 %v85
    %122 = vmatprep.subr.bf16.mxu0 0
    %123 = vmatpush1.bf16.msra.mxu0 %v96
    %124 = vmatprep.subr.bf16.mxu0 0
    %125 = vmatpush1.bf16.msra.mxu0 0
    %126 = vmatprep.subr.bf16.mxu0 0
    %127 = vmatpush1.bf16.msra.mxu0 0
    %128 = vmatprep.subr.bf16.mxu0 0
    %129 = vmatpush1.bf16.msra.mxu0 0
    %130 = vmatprep.mubr.bf16.mxu0 %v89
    %131 = vmatmul.mubr.bf16.gmra.mrb[0].mxu0 %v45
    %v132 = vpop.f32.mrb[0].mxu0
    %v133 = vadd.f32 0.0, %v132
    %v134 = vpop.f32.mrb[0].mxu0
    %v135 = vpop.f32.mrb[0].mxu0
    %v136 = vadd.f32 0.0, %v135
    %v137 = vpop.f32.mrb[0].mxu0
    %138 = vmatprep.mubr.bf16.mxu0 %v92
    %139 = vmatmul.mubr.bf16.gmra.mrb[0].mxu0 %v47
    %v140 = vpop.f32.mrb[0].mxu0
    %v141 = vadd.f32 0.0, %v140
    %v142 = vpop.f32.mrb[0].mxu0
    %v143 = vpop.f32.mrb[0].mxu0
    %v144 = vpop.f32.mrb[0].mxu0
    %145 = vdwg.mxu0
    %v146 = vadd.f32 %v36, %v133
    %v147 = vadd.f32 %v37, %v136
    %v148 = vadd.f32 %v38, %v141
    %vm149 = vcmask 523264
    %150 = vst.msk [vmem:[#allocation2] sm:$0xff] %vm149, %v146
    %151 = vst.msk [vmem:[#allocation2 + $0x8] sm:$0xff] %vm149, %v147
    %152 = vst.msk [vmem:[#allocation2 + $0x10] sm:$0xff] %vm149, %v148
    // Predicated region
    $region34: #{tpu_custom_call.1} parent=1 // pred_check
      %p153 = pneg %p28
    $region35: #{tpu_custom_call.1} parent=1 // pred_check_branch
      %155 = sbr.rel (%p153) target = $region37
    $region36: #{tpu_custom_call.1} parent=1 // pred_region
      %v156 = vld [vmem:[#allocation2] sm:$0xff]
      %v157 = vld [vmem:[#allocation2 + $0x8] sm:$0xff]
      %v158 = vld [vmem:[#allocation2 + $0x10] sm:$0xff]
      %v159 = vld [vmem:[%s3] sm:$0xff]
      %v160 = vld [vmem:[%s3 + $0x8] sm:$0xff]
      %v161 = vld [vmem:[%s3 + $0x10] sm:$0xff]
      %163 = vset.pattern.permute.xlu0 0
      %164 = vperm.xlu0 %163, %v159
      %v165 = vpop.permute.xlu0 %164
      %168 = vset.pattern.permute.xlu0 0
      %169 = vperm.xlu0 %168, %v160
      %v170 = vpop.permute.xlu0 %169
      %173 = vset.pattern.permute.xlu0 0
      %174 = vperm.xlu0 %173, %v161
      %v175 = vpop.permute.xlu0 %174
      %v177 = vmul.f32 %v156, %v165
      %v178 = vmul.f32 %v157, %v170
      %v179 = vmul.f32 %v158, %v175
      %v180 = vld [vmem:[%s0] sm:$0xff]
      %v181 = vld [vmem:[%s0 + $0x8] sm:$0xff]
      %v182 = vld [vmem:[%s0 + $0x10] sm:$0xff]
      %v183 = vpack.c.bf16 %v181, %v180
      %v184 = vpack.c.bf16 %v182, %v182
      %v185 = vld [vmem:[%s4] sm:$0xf]
      %v186 = vld [vmem:[%s4 + $0x4] sm:$0xf]
      %v187 = vld [vmem:[%s4 + $0x8] sm:$0xf]
      %v188 = vld [vmem:[%s4 + $0xc] sm:$0xf]
      %v189 = vld [vmem:[%s4 + $0x10] sm:$0xf]
      %v190 = vld [vmem:[%s4 + $0x14] sm:$0xf]
      %v191 = vld [vmem:[%s4 + $0x18] sm:$0xf]
      %v192 = vld [vmem:[%s4 + $0x1c] sm:$0xf]
      %v193 = vpack.c.bf16 %v178, %v177
      %v194 = vpack.c.bf16 %v179, %v179
      %v195 = vld [vmem:[%s5] sm:$0xf]
      %v196 = vld [vmem:[%s5 + $0x4] sm:$0xf]
      %v197 = vld [vmem:[%s5 + $0x8] sm:$0xf]
      %v198 = vld [vmem:[%s5 + $0xc] sm:$0xf]
      %v199 = vld [vmem:[%s5 + $0x10] sm:$0xf]
      %v200 = vld [vmem:[%s5 + $0x14] sm:$0xf]
      %v201 = vld [vmem:[%s5 + $0x18] sm:$0xf]
      %v202 = vld [vmem:[%s5 + $0x1c] sm:$0xf]
      %v211 = vunpack.c.l.b16 %v195
      %v212 = vunpack.c.l.b16 %v196
      %v213 = vunpack.c.l.b16 %v197
      %v214 = vunpack.c.l.b16 %v198
      %v215 = vunpack.c.l.b16 %v199
      %v216 = vunpack.c.l.b16 %v200
      %v217 = vunpack.c.l.b16 %v201
      %v218 = vunpack.c.l.b16 %v202
      %v219 = vpack.c.b16 %v212, %v211
      %v220 = vpack.c.b16 %v214, %v213
      %v221 = vpack.c.b16 %v216, %v215
      %v222 = vpack.c.b16 %v218, %v217
      %v228 = vsel %vm149, %v193, 0
      %v231 = vsel %vm149, %v194, 0
      %233 = vmatprep.subr.bf16.mxu0 0
      %234 = vmatpush1.bf16.msra.mxu0 %v219
      %235 = vmatprep.subr.bf16.mxu0 0
      %236 = vmatpush1.bf16.msra.mxu0 %v220
      %237 = vmatprep.subr.bf16.mxu0 0
      %238 = vmatpush1.bf16.msra.mxu0 %v221
      %239 = vmatprep.subr.bf16.mxu0 0
      %240 = vmatpush1.bf16.msra.mxu0 %v222
      %241 = vmatprep.subr.bf16.mxu0 0
      %242 = vmatpush1.bf16.msra.mxu0 0
      %243 = vmatprep.subr.bf16.mxu0 0
      %244 = vmatpush1.bf16.msra.mxu0 0
      %245 = vmatprep.subr.bf16.mxu0 0
      %246 = vmatpush1.bf16.msra.mxu0 0
      %247 = vmatprep.subr.bf16.mxu0 0
      %248 = vmatpush1.bf16.msra.mxu0 0
      %249 = vmatprep.subr.bf16.mxu0 0
      %250 = vmatpush1.bf16.msra.mxu0 0
      %251 = vmatprep.subr.bf16.mxu0 0
      %252 = vmatpush1.bf16.msra.mxu0 0
      %253 = vmatprep.subr.bf16.mxu0 0
      %254 = vmatpush1.bf16.msra.mxu0 0
      %255 = vmatprep.subr.bf16.mxu0 0
      %256 = vmatpush1.bf16.msra.mxu0 0
      %257 = vmatprep.subr.bf16.mxu0 0
      %258 = vmatpush1.bf16.msra.mxu0 0
      %259 = vmatprep.subr.bf16.mxu0 0
      %260 = vmatpush1.bf16.msra.mxu0 0
      %261 = vmatprep.subr.bf16.mxu0 0
      %262 = vmatpush1.bf16.msra.mxu0 0
      %263 = vmatprep.subr.bf16.mxu0 0
      %264 = vmatpush1.bf16.msra.mxu0 0
      %265 = vmatprep.mubr.bf16.mxu0 0
      %266 = vmatmul.mubr.bf16.gmra.mrb[0].mxu0 %v228
      %v267 = vpop.f32.mrb[0].mxu0
      %v268 = vadd.f32 0.0, %v267
      %v269 = vpop.f32.mrb[0].mxu0
      %v270 = vpop.f32.mrb[0].mxu0
      %v271 = vadd.f32 0.0, %v270
      %v272 = vpop.f32.mrb[0].mxu0
      %273 = vmatprep.mubr.bf16.mxu0 0
      %274 = vmatmul.mubr.bf16.gmra.mrb[0].mxu0 %v231
      %v275 = vpop.f32.mrb[0].mxu0
      %v276 = vadd.f32 0.0, %v275
      %v277 = vpop.f32.mrb[0].mxu0
      %v278 = vpop.f32.mrb[0].mxu0
      %v279 = vpop.f32.mrb[0].mxu0
      %280 = vdwg.mxu0
      %v289 = vunpack.c.l.b16 %v185
      %v290 = vunpack.c.l.b16 %v186
      %v291 = vunpack.c.l.b16 %v187
      %v292 = vunpack.c.l.b16 %v188
      %v293 = vunpack.c.l.b16 %v189
      %v294 = vunpack.c.l.b16 %v190
      %v295 = vunpack.c.l.b16 %v191
      %v296 = vunpack.c.l.b16 %v192
      %v297 = vpack.c.b16 %v290, %v289
      %v298 = vpack.c.b16 %v292, %v291
      %v299 = vpack.c.b16 %v294, %v293
      %v300 = vpack.c.b16 %v296, %v295
      %v306 = vsel %vm149, %v183, 0
      %v309 = vsel %vm149, %v184, 0
      %311 = vmatprep.subr.bf16.mxu0 0
      %312 = vmatpush1.bf16.msra.mxu0 %v297
      %313 = vmatprep.subr.bf16.mxu0 0
      %314 = vmatpush1.bf16.msra.mxu0 %v298
      %315 = vmatprep.subr.bf16.mxu0 0
      %316 = vmatpush1.bf16.msra.mxu0 %v299
      %317 = vmatprep.subr.bf16.mxu0 0
      %318 = vmatpush1.bf16.msra.mxu0 %v300
      %319 = vmatprep.subr.bf16.mxu0 0
      %320 = vmatpush1.bf16.msra.mxu0 0
      %321 = vmatprep.subr.bf16.mxu0 0
      %322 = vmatpush1.bf16.msra.mxu0 0
      %323 = vmatprep.subr.bf16.mxu0 0
      %324 = vmatpush1.bf16.msra.mxu0 0
      %325 = vmatprep.subr.bf16.mxu0 0
      %326 = vmatpush1.bf16.msra.mxu0 0
      %327 = vmatprep.subr.bf16.mxu0 0
      %328 = vmatpush1.bf16.msra.mxu0 0
      %329 = vmatprep.subr.bf16.mxu0 0
      %330 = vmatpush1.bf16.msra.mxu0 0
      %331 = vmatprep.subr.bf16.mxu0 0
      %332 = vmatpush1.bf16.msra.mxu0 0
      %333 = vmatprep.subr.bf16.mxu0 0
      %334 = vmatpush1.bf16.msra.mxu0 0
      %335 = vmatprep.subr.bf16.mxu0 0
      %336 = vmatpush1.bf16.msra.mxu0 0
      %337 = vmatprep.subr.bf16.mxu0 0
      %338 = vmatpush1.bf16.msra.mxu0 0
      %339 = vmatprep.subr.bf16.mxu0 0
      %340 = vmatpush1.bf16.msra.mxu0 0
      %341 = vmatprep.subr.bf16.mxu0 0
      %342 = vmatpush1.bf16.msra.mxu0 0
      %343 = vmatprep.mubr.bf16.mxu0 0
      %344 = vmatmul.mubr.bf16.gmra.mrb[0].mxu0 %v306
      %v345 = vpop.f32.mrb[0].mxu0
      %v346 = vadd.f32 %v268, %v345
      %v347 = vpop.f32.mrb[0].mxu0
      %v348 = vpop.f32.mrb[0].mxu0
      %v349 = vadd.f32 %v271, %v348
      %v350 = vpop.f32.mrb[0].mxu0
      %351 = vmatprep.mubr.bf16.mxu0 0
      %352 = vmatmul.mubr.bf16.gmra.mrb[0].mxu0 %v309
      %v353 = vpop.f32.mrb[0].mxu0
      %v354 = vadd.f32 %v276, %v353
      %v355 = vpop.f32.mrb[0].mxu0
      %v356 = vpop.f32.mrb[0].mxu0
      %v357 = vpop.f32.mrb[0].mxu0
      %358 = vdwg.mxu0
      %v359 = vld [vmem:[%s6] sm:$0x1]
      %v361 = vlaneseq
      %v362 = vshrl.u32 %v361, 7
      %v363 = vsub.s32 0, %v362
      %v364 = vrot.slane %v359, %v363
      %v366 = vadd.f32 %v346, %v364
      %v367 = vadd.f32 %v349, %v364
      %v368 = vadd.f32 %v354, %v364
      %v369 = vmax.f32 %v366, 0.0
      %v370 = vmax.f32 %v367, 0.0
      %v371 = vmax.f32 %v368, 0.0
      %372 = vst.msk [vmem:[#allocation3] sm:$0xff] %vm149, %v369
      %373 = vst.msk [vmem:[#allocation3 + $0x8] sm:$0xff] %vm149, %v370
      %374 = vst.msk [vmem:[#allocation3 + $0x10] sm:$0xff] %vm149, %v371
    $region37: #{tpu_custom_call.1} parent=1 // pred_fallthru
      _
    // Predicated region
    $region38: #{tpu_custom_call.1} parent=1 // pred_check
      _
    $region39: #{tpu_custom_call.1} parent=1 // pred_check_branch
      %376 = sbr.rel (0) target = $region41
    $region40: #{tpu_custom_call.1} parent=1 // pred_region
      %s378 = ssub.s32 384, 384
      %379 = vsyncadd [#allocation4], %s378
      %s380 = sshll.u32 [#allocation3], 4
      %s381 = int_to_ptr.vmem [resolvable:$true] %s380
      %386 = dma.vmem_to_hbm [thread:$0]  %s381, 384, %s7, [#allocation4], 128, 128, 8
    $region41: #{tpu_custom_call.1} parent=1 // pred_fallthru
      _
    // Predicated region
    $region42: #{tpu_custom_call.1} parent=1 // pred_check
      _
    $region43: #{tpu_custom_call.1} parent=1 // pred_check_branch
      %388 = sbr.rel (0) target = $region45
    $region44: #{tpu_custom_call.1} parent=1 // pred_region
      %389 = dma.done [#allocation4], 384
    $region45: #{tpu_custom_call.1} parent=1 // pred_fallthru
      _
    %390 = vsyncpa [#allocation4], 1

</llo_original>
